<compile_context>
chip_gen: v7x
topology: tpu7x:2x2x1
jax: 0.10.0
libtpu: 0.0.40
codegen_flags: <defaults>
</compile_context>

<pallas_src>
import jax
import jax.numpy as jnp
from jax import lax
from jax.experimental import pallas as pl
from jax.experimental.pallas import tpu as pltpu


def lstm_univariate_kernel(x_ref, p_ref, out_ref):
    # p_ref row layout (feature on the lane axis):
    #   0:4   w_ih  per gate (i, f, g, o)  -- one scalar per feature
    #   4:8   w_hh  per gate
    #   8:12  b     per gate (= b_ih + b_hh, pre-summed)
    #   12    h0
    #   13    c0
    w_ih = p_ref[0:4, :]        # (4, F)
    w_hh = p_ref[4:8, :]        # (4, F)
    b = p_ref[8:12, :]          # (4, F)
    h0 = p_ref[12:13, :]        # (1, F)
    c0 = p_ref[13:14, :]        # (1, F)

    T = x_ref.shape[0]          # static

    def step(t, carry):
        h, c = carry
        x_t = x_ref[pl.ds(t, 1), :]                       # (1, F)
        # input_size == hidden_size == 1, so the "matmuls" are elementwise.
        gates = w_ih * x_t + w_hh * h + b                 # (4, F)
        i_g = jax.nn.sigmoid(gates[0:1, :])
        f_g = jax.nn.sigmoid(gates[1:2, :])
        g_g = jnp.tanh(gates[2:3, :])
        o_g = jax.nn.sigmoid(gates[3:4, :])
        c_new = f_g * c + i_g * g_g
        h_new = o_g * jnp.tanh(c_new)
        out_ref[pl.ds(t, 1), :] = 2.0 * h_new             # out = 2 * lstm output
        return (h_new, c_new)

    lax.fori_loop(0, T, step, (h0, c0), unroll=(T <= 32))


def init_params(key, feats):
    """Per-feature scalar LSTM params (PyTorch default init: U(-1, 1) since
    1/sqrt(hidden_size) == 1) plus the random initial (h0, c0) the torch
    forward draws each call."""
    ks = jax.random.split(key, 6)

    def uni(k, shape):
        return jax.random.uniform(k, shape, jnp.float32, -1.0, 1.0)

    w_ih = uni(ks[0], (4, feats))
    w_hh = uni(ks[1], (4, feats))
    b_ih = uni(ks[2], (4, feats))
    b_hh = uni(ks[3], (4, feats))
    # TODO(synk): torch draws h0/c0 in float64; TPU vector units have no f64,
    # so they are reproduced in float32.
    h0 = jax.random.uniform(ks[4], (1, feats), jnp.float32)      # torch.rand
    c0 = jax.random.normal(ks[5], (1, feats), jnp.float32)       # torch.randn
    return {"w_ih": w_ih, "w_hh": w_hh, "b": b_ih + b_hh, "h0": h0, "c0": c0}


def lstm_univariate_forward(x, params):
    """x: (T, feats) -> (T, feats), matching torch.stack(outputs)."""
    T, F = x.shape
    slab = jnp.concatenate(
        [params["w_ih"], params["w_hh"], params["b"], params["h0"], params["c0"]],
        axis=0).astype(jnp.float32)                               # (14, F)

    vm = pl.BlockSpec(memory_space=pltpu.MemorySpace.VMEM)
    bytes_io = 4 * (T * F + slab.size + T * F)
    cost = pl.CostEstimate(flops=30 * T * F, transcendentals=5 * T * F,
                           bytes_accessed=bytes_io)

    return pl.pallas_call(
        lstm_univariate_kernel,
        out_shape=jax.ShapeDtypeStruct((T, F), jnp.float32),
        in_specs=[vm, vm],
        out_specs=vm,
        cost_estimate=cost,
    )(x.astype(jnp.float32), slab)


def lstm_univariate_ref(x, params):
    """Pure-JAX reference for correctness checking."""
    w_ih, w_hh, b = params["w_ih"], params["w_hh"], params["b"]
    h, c = params["h0"], params["c0"]
    outs = []
    for t in range(x.shape[0]):
        gates = w_ih * x[t:t + 1, :] + w_hh * h + b
        i = jax.nn.sigmoid(gates[0:1, :])
        f = jax.nn.sigmoid(gates[1:2, :])
        g = jnp.tanh(gates[2:3, :])
        o = jax.nn.sigmoid(gates[3:4, :])
        c = f * c + i * g
        h = o * jnp.tanh(c)
        outs.append(2.0 * h)
    return jnp.concatenate(outs, axis=0)


if __name__ == "__main__":
    import numpy as np

    T, feats = 8, 16
    key = jax.random.PRNGKey(0)
    k_param, k_x = jax.random.split(key)

    params = init_params(k_param, feats)
    x = jax.random.normal(k_x, (T, feats), jnp.float32)   # T timesteps, feats features

    out = lstm_univariate_forward(x, params)
    jax.block_until_ready(out)
    assert out.shape == (T, feats)

    ref = lstm_univariate_ref(x, params)
    np.testing.assert_allclose(np.asarray(out), np.asarray(ref), rtol=1e-5, atol=1e-5)
    print("KERNEL_OK")
</pallas_src>

<mosaic_0001>
module attributes {stable_mosaic.version = 11 : i64} {
  func.func @lstm_univariate_kernel(%arg0: memref<8x16xf32, #tpu.memory_space<vmem>>, %arg1: memref<14x16xf32, #tpu.memory_space<vmem>>, %arg2: memref<8x16xf32, #tpu.memory_space<vmem>>) attributes {dimension_semantics = [], scalar_prefetch = 0 : i64, scratch_operands = 0 : i64, tpu.core_type = #tpu.core_type<tc>} {
    %c0 = arith.constant 0 : index
    %c0_0 = arith.constant 0 : index
    %0 = vector.load %arg1[%c0, %c0_0] : memref<14x16xf32, #tpu.memory_space<vmem>>, vector<4x16xf32>
    %c4 = arith.constant 4 : index
    %c0_1 = arith.constant 0 : index
    %1 = vector.load %arg1[%c4, %c0_1] : memref<14x16xf32, #tpu.memory_space<vmem>>, vector<4x16xf32>
    %c8 = arith.constant 8 : index
    %c0_2 = arith.constant 0 : index
    %2 = vector.load %arg1[%c8, %c0_2] : memref<14x16xf32, #tpu.memory_space<vmem>>, vector<4x16xf32>
    %c12 = arith.constant 12 : index
    %c0_3 = arith.constant 0 : index
    %3 = vector.load %arg1[%c12, %c0_3] : memref<14x16xf32, #tpu.memory_space<vmem>>, vector<1x16xf32>
    %c13 = arith.constant 13 : index
    %c0_4 = arith.constant 0 : index
    %4 = vector.load %arg1[%c13, %c0_4] : memref<14x16xf32, #tpu.memory_space<vmem>>, vector<1x16xf32>
    %c0_i32 = arith.constant 0 : i32
    %5 = arith.index_cast %c0_i32 : i32 to index
    %c0_5 = arith.constant 0 : index
    %6 = vector.load %arg0[%5, %c0_5] : memref<8x16xf32, #tpu.memory_space<vmem>>, vector<1x16xf32>
    %7 = vector.broadcast %6 : vector<1x16xf32> to vector<4x16xf32>
    %8 = arith.mulf %0, %7 : vector<4x16xf32>
    %9 = vector.broadcast %3 : vector<1x16xf32> to vector<4x16xf32>
    %10 = arith.mulf %1, %9 : vector<4x16xf32>
    %11 = arith.addf %8, %10 : vector<4x16xf32>
    %12 = arith.addf %11, %2 : vector<4x16xf32>
    %13 = vector.extract_strided_slice %12 {offsets = [0, 0], sizes = [1, 16], strides = [1, 1]} : vector<4x16xf32> to vector<1x16xf32>
    %14 = arith.negf %13 : vector<1x16xf32>
    %15 = math.exp %14 : vector<1x16xf32>
    %cst = arith.constant 1.000000e+00 : f32
    %16 = vector.broadcast %cst : f32 to vector<1x16xf32>
    %17 = arith.addf %16, %15 : vector<1x16xf32>
    %18 = arith.divf %16, %17 : vector<1x16xf32>
    %19 = vector.extract_strided_slice %12 {offsets = [1, 0], sizes = [1, 16], strides = [1, 1]} : vector<4x16xf32> to vector<1x16xf32>
    %20 = arith.negf %19 : vector<1x16xf32>
    %21 = math.exp %20 : vector<1x16xf32>
    %cst_6 = arith.constant 1.000000e+00 : f32
    %22 = vector.broadcast %cst_6 : f32 to vector<1x16xf32>
    %23 = arith.addf %22, %21 : vector<1x16xf32>
    %24 = arith.divf %22, %23 : vector<1x16xf32>
    %25 = vector.extract_strided_slice %12 {offsets = [2, 0], sizes = [1, 16], strides = [1, 1]} : vector<4x16xf32> to vector<1x16xf32>
    %26 = math.tanh %25 : vector<1x16xf32>
    %27 = vector.extract_strided_slice %12 {offsets = [3, 0], sizes = [1, 16], strides = [1, 1]} : vector<4x16xf32> to vector<1x16xf32>
    %28 = arith.negf %27 : vector<1x16xf32>
    %29 = math.exp %28 : vector<1x16xf32>
    %cst_7 = arith.constant 1.000000e+00 : f32
    %30 = vector.broadcast %cst_7 : f32 to vector<1x16xf32>
    %31 = arith.addf %30, %29 : vector<1x16xf32>
    %32 = arith.divf %30, %31 : vector<1x16xf32>
    %33 = arith.mulf %24, %4 : vector<1x16xf32>
    %34 = arith.mulf %18, %26 : vector<1x16xf32>
    %35 = arith.addf %33, %34 : vector<1x16xf32>
    %36 = math.tanh %35 : vector<1x16xf32>
    %37 = arith.mulf %32, %36 : vector<1x16xf32>
    %cst_8 = arith.constant 2.000000e+00 : f32
    %38 = vector.broadcast %cst_8 : f32 to vector<1x16xf32>
    %39 = arith.mulf %38, %37 : vector<1x16xf32>
    %40 = arith.index_cast %c0_i32 : i32 to index
    %c0_9 = arith.constant 0 : index
    %41 = vector.load %arg2[%40, %c0_9] : memref<8x16xf32, #tpu.memory_space<vmem>>, vector<1x16xf32>
    tpu.vector_store %arg2[%40, %c0_9], %39 {strides = array<i32>} : memref<8x16xf32, #tpu.memory_space<vmem>>, vector<1x16xf32>,
    %c1_i32 = arith.constant 1 : i32
    %42 = arith.index_cast %c1_i32 : i32 to index
    %c0_10 = arith.constant 0 : index
    %43 = vector.load %arg0[%42, %c0_10] : memref<8x16xf32, #tpu.memory_space<vmem>>, vector<1x16xf32>
    %44 = vector.broadcast %43 : vector<1x16xf32> to vector<4x16xf32>
    %45 = arith.mulf %0, %44 : vector<4x16xf32>
    %46 = vector.broadcast %37 : vector<1x16xf32> to vector<4x16xf32>
    %47 = arith.mulf %1, %46 : vector<4x16xf32>
    %48 = arith.addf %45, %47 : vector<4x16xf32>
    %49 = arith.addf %48, %2 : vector<4x16xf32>
    %50 = vector.extract_strided_slice %49 {offsets = [0, 0], sizes = [1, 16], strides = [1, 1]} : vector<4x16xf32> to vector<1x16xf32>
    %51 = arith.negf %50 : vector<1x16xf32>
    %52 = math.exp %51 : vector<1x16xf32>
    %cst_11 = arith.constant 1.000000e+00 : f32
    %53 = vector.broadcast %cst_11 : f32 to vector<1x16xf32>
    %54 = arith.addf %53, %52 : vector<1x16xf32>
    %55 = arith.divf %53, %54 : vector<1x16xf32>
    %56 = vector.extract_strided_slice %49 {offsets = [1, 0], sizes = [1, 16], strides = [1, 1]} : vector<4x16xf32> to vector<1x16xf32>
    %57 = arith.negf %56 : vector<1x16xf32>
    %58 = math.exp %57 : vector<1x16xf32>
    %cst_12 = arith.constant 1.000000e+00 : f32
    %59 = vector.broadcast %cst_12 : f32 to vector<1x16xf32>
    %60 = arith.addf %59, %58 : vector<1x16xf32>
    %61 = arith.divf %59, %60 : vector<1x16xf32>
    %62 = vector.extract_strided_slice %49 {offsets = [2, 0], sizes = [1, 16], strides = [1, 1]} : vector<4x16xf32> to vector<1x16xf32>
    %63 = math.tanh %62 : vector<1x16xf32>
    %64 = vector.extract_strided_slice %49 {offsets = [3, 0], sizes = [1, 16], strides = [1, 1]} : vector<4x16xf32> to vector<1x16xf32>
    %65 = arith.negf %64 : vector<1x16xf32>
    %66 = math.exp %65 : vector<1x16xf32>
    %cst_13 = arith.constant 1.000000e+00 : f32
    %67 = vector.broadcast %cst_13 : f32 to vector<1x16xf32>
    %68 = arith.addf %67, %66 : vector<1x16xf32>
    %69 = arith.divf %67, %68 : vector<1x16xf32>
    %70 = arith.mulf %61, %35 : vector<1x16xf32>
    %71 = arith.mulf %55, %63 : vector<1x16xf32>
    %72 = arith.addf %70, %71 : vector<1x16xf32>
    %73 = math.tanh %72 : vector<1x16xf32>
    %74 = arith.mulf %69, %73 : vector<1x16xf32>
    %cst_14 = arith.constant 2.000000e+00 : f32
    %75 = vector.broadcast %cst_14 : f32 to vector<1x16xf32>
    %76 = arith.mulf %75, %74 : vector<1x16xf32>
    %77 = arith.index_cast %c1_i32 : i32 to index
    %c0_15 = arith.constant 0 : index
    %78 = vector.load %arg2[%77, %c0_15] : memref<8x16xf32, #tpu.memory_space<vmem>>, vector<1x16xf32>
    tpu.vector_store %arg2[%77, %c0_15], %76 {strides = array<i32>} : memref<8x16xf32, #tpu.memory_space<vmem>>, vector<1x16xf32>,
    %c2_i32 = arith.constant 2 : i32
    %79 = arith.index_cast %c2_i32 : i32 to index
    %c0_16 = arith.constant 0 : index
    %80 = vector.load %arg0[%79, %c0_16] : memref<8x16xf32, #tpu.memory_space<vmem>>, vector<1x16xf32>
    %81 = vector.broadcast %80 : vector<1x16xf32> to vector<4x16xf32>
    %82 = arith.mulf %0, %81 : vector<4x16xf32>
    %83 = vector.broadcast %74 : vector<1x16xf32> to vector<4x16xf32>
    %84 = arith.mulf %1, %83 : vector<4x16xf32>
    %85 = arith.addf %82, %84 : vector<4x16xf32>
    %86 = arith.addf %85, %2 : vector<4x16xf32>
    %87 = vector.extract_strided_slice %86 {offsets = [0, 0], sizes = [1, 16], strides = [1, 1]} : vector<4x16xf32> to vector<1x16xf32>
    %88 = arith.negf %87 : vector<1x16xf32>
    %89 = math.exp %88 : vector<1x16xf32>
    %cst_17 = arith.constant 1.000000e+00 : f32
    %90 = vector.broadcast %cst_17 : f32 to vector<1x16xf32>
    %91 = arith.addf %90, %89 : vector<1x16xf32>
    %92 = arith.divf %90, %91 : vector<1x16xf32>
    %93 = vector.extract_strided_slice %86 {offsets = [1, 0], sizes = [1, 16], strides = [1, 1]} : vector<4x16xf32> to vector<1x16xf32>
    %94 = arith.negf %93 : vector<1x16xf32>
    %95 = math.exp %94 : vector<1x16xf32>
    %cst_18 = arith.constant 1.000000e+00 : f32
    %96 = vector.broadcast %cst_18 : f32 to vector<1x16xf32>
    %97 = arith.addf %96, %95 : vector<1x16xf32>
    %98 = arith.divf %96, %97 : vector<1x16xf32>
    %99 = vector.extract_strided_slice %86 {offsets = [2, 0], sizes = [1, 16], strides = [1, 1]} : vector<4x16xf32> to vector<1x16xf32>
    %100 = math.tanh %99 : vector<1x16xf32>
    %101 = vector.extract_strided_slice %86 {offsets = [3, 0], sizes = [1, 16], strides = [1, 1]} : vector<4x16xf32> to vector<1x16xf32>
    %102 = arith.negf %101 : vector<1x16xf32>
    %103 = math.exp %102 : vector<1x16xf32>
    %cst_19 = arith.constant 1.000000e+00 : f32
    %104 = vector.broadcast %cst_19 : f32 to vector<1x16xf32>
    %105 = arith.addf %104, %103 : vector<1x16xf32>
    %106 = arith.divf %104, %105 : vector<1x16xf32>
    %107 = arith.mulf %98, %72 : vector<1x16xf32>
    %108 = arith.mulf %92, %100 : vector<1x16xf32>
    %109 = arith.addf %107, %108 : vector<1x16xf32>
    %110 = math.tanh %109 : vector<1x16xf32>
    %111 = arith.mulf %106, %110 : vector<1x16xf32>
    %cst_20 = arith.constant 2.000000e+00 : f32
    %112 = vector.broadcast %cst_20 : f32 to vector<1x16xf32>
    %113 = arith.mulf %112, %111 : vector<1x16xf32>
    %114 = arith.index_cast %c2_i32 : i32 to index
    %c0_21 = arith.constant 0 : index
    %115 = vector.load %arg2[%114, %c0_21] : memref<8x16xf32, #tpu.memory_space<vmem>>, vector<1x16xf32>
    tpu.vector_store %arg2[%114, %c0_21], %113 {strides = array<i32>} : memref<8x16xf32, #tpu.memory_space<vmem>>, vector<1x16xf32>,
    %c3_i32 = arith.constant 3 : i32
    %116 = arith.index_cast %c3_i32 : i32 to index
    %c0_22 = arith.constant 0 : index
    %117 = vector.load %arg0[%116, %c0_22] : memref<8x16xf32, #tpu.memory_space<vmem>>, vector<1x16xf32>
    %118 = vector.broadcast %117 : vector<1x16xf32> to vector<4x16xf32>
    %119 = arith.mulf %0, %118 : vector<4x16xf32>
    %120 = vector.broadcast %111 : vector<1x16xf32> to vector<4x16xf32>
    %121 = arith.mulf %1, %120 : vector<4x16xf32>
    %122 = arith.addf %119, %121 : vector<4x16xf32>
    %123 = arith.addf %122, %2 : vector<4x16xf32>
    %124 = vector.extract_strided_slice %123 {offsets = [0, 0], sizes = [1, 16], strides = [1, 1]} : vector<4x16xf32> to vector<1x16xf32>
    %125 = arith.negf %124 : vector<1x16xf32>
    %126 = math.exp %125 : vector<1x16xf32>
    %cst_23 = arith.constant 1.000000e+00 : f32
    %127 = vector.broadcast %cst_23 : f32 to vector<1x16xf32>
    %128 = arith.addf %127, %126 : vector<1x16xf32>
    %129 = arith.divf %127, %128 : vector<1x16xf32>
    %130 = vector.extract_strided_slice %123 {offsets = [1, 0], sizes = [1, 16], strides = [1, 1]} : vector<4x16xf32> to vector<1x16xf32>
    %131 = arith.negf %130 : vector<1x16xf32>
    %132 = math.exp %131 : vector<1x16xf32>
    %cst_24 = arith.constant 1.000000e+00 : f32
    %133 = vector.broadcast %cst_24 : f32 to vector<1x16xf32>
    %134 = arith.addf %133, %132 : vector<1x16xf32>
    %135 = arith.divf %133, %134 : vector<1x16xf32>
    %136 = vector.extract_strided_slice %123 {offsets = [2, 0], sizes = [1, 16], strides = [1, 1]} : vector<4x16xf32> to vector<1x16xf32>
    %137 = math.tanh %136 : vector<1x16xf32>
    %138 = vector.extract_strided_slice %123 {offsets = [3, 0], sizes = [1, 16], strides = [1, 1]} : vector<4x16xf32> to vector<1x16xf32>
    %139 = arith.negf %138 : vector<1x16xf32>
    %140 = math.exp %139 : vector<1x16xf32>
    %cst_25 = arith.constant 1.000000e+00 : f32
    %141 = vector.broadcast %cst_25 : f32 to vector<1x16xf32>
    %142 = arith.addf %141, %140 : vector<1x16xf32>
    %143 = arith.divf %141, %142 : vector<1x16xf32>
    %144 = arith.mulf %135, %109 : vector<1x16xf32>
    %145 = arith.mulf %129, %137 : vector<1x16xf32>
    %146 = arith.addf %144, %145 : vector<1x16xf32>
    %147 = math.tanh %146 : vector<1x16xf32>
    %148 = arith.mulf %143, %147 : vector<1x16xf32>
    %cst_26 = arith.constant 2.000000e+00 : f32
    %149 = vector.broadcast %cst_26 : f32 to vector<1x16xf32>
    %150 = arith.mulf %149, %148 : vector<1x16xf32>
    %151 = arith.index_cast %c3_i32 : i32 to index
    %c0_27 = arith.constant 0 : index
    %152 = vector.load %arg2[%151, %c0_27] : memref<8x16xf32, #tpu.memory_space<vmem>>, vector<1x16xf32>
    tpu.vector_store %arg2[%151, %c0_27], %150 {strides = array<i32>} : memref<8x16xf32, #tpu.memory_space<vmem>>, vector<1x16xf32>,
    %c4_i32 = arith.constant 4 : i32
    %153 = arith.index_cast %c4_i32 : i32 to index
    %c0_28 = arith.constant 0 : index
    %154 = vector.load %arg0[%153, %c0_28] : memref<8x16xf32, #tpu.memory_space<vmem>>, vector<1x16xf32>
    %155 = vector.broadcast %154 : vector<1x16xf32> to vector<4x16xf32>
    %156 = arith.mulf %0, %155 : vector<4x16xf32>
    %157 = vector.broadcast %148 : vector<1x16xf32> to vector<4x16xf32>
    %158 = arith.mulf %1, %157 : vector<4x16xf32>
    %159 = arith.addf %156, %158 : vector<4x16xf32>
    %160 = arith.addf %159, %2 : vector<4x16xf32>
    %161 = vector.extract_strided_slice %160 {offsets = [0, 0], sizes = [1, 16], strides = [1, 1]} : vector<4x16xf32> to vector<1x16xf32>
    %162 = arith.negf %161 : vector<1x16xf32>
    %163 = math.exp %162 : vector<1x16xf32>
    %cst_29 = arith.constant 1.000000e+00 : f32
    %164 = vector.broadcast %cst_29 : f32 to vector<1x16xf32>
    %165 = arith.addf %164, %163 : vector<1x16xf32>
    %166 = arith.divf %164, %165 : vector<1x16xf32>
    %167 = vector.extract_strided_slice %160 {offsets = [1, 0], sizes = [1, 16], strides = [1, 1]} : vector<4x16xf32> to vector<1x16xf32>
    %168 = arith.negf %167 : vector<1x16xf32>
    %169 = math.exp %168 : vector<1x16xf32>
    %cst_30 = arith.constant 1.000000e+00 : f32
    %170 = vector.broadcast %cst_30 : f32 to vector<1x16xf32>
    %171 = arith.addf %170, %169 : vector<1x16xf32>
    %172 = arith.divf %170, %171 : vector<1x16xf32>
    %173 = vector.extract_strided_slice %160 {offsets = [2, 0], sizes = [1, 16], strides = [1, 1]} : vector<4x16xf32> to vector<1x16xf32>
    %174 = math.tanh %173 : vector<1x16xf32>
    %175 = vector.extract_strided_slice %160 {offsets = [3, 0], sizes = [1, 16], strides = [1, 1]} : vector<4x16xf32> to vector<1x16xf32>
    %176 = arith.negf %175 : vector<1x16xf32>
    %177 = math.exp %176 : vector<1x16xf32>
    %cst_31 = arith.constant 1.000000e+00 : f32
    %178 = vector.broadcast %cst_31 : f32 to vector<1x16xf32>
    %179 = arith.addf %178, %177 : vector<1x16xf32>
    %180 = arith.divf %178, %179 : vector<1x16xf32>
    %181 = arith.mulf %172, %146 : vector<1x16xf32>
    %182 = arith.mulf %166, %174 : vector<1x16xf32>
    %183 = arith.addf %181, %182 : vector<1x16xf32>
    %184 = math.tanh %183 : vector<1x16xf32>
    %185 = arith.mulf %180, %184 : vector<1x16xf32>
    %cst_32 = arith.constant 2.000000e+00 : f32
    %186 = vector.broadcast %cst_32 : f32 to vector<1x16xf32>
    %187 = arith.mulf %186, %185 : vector<1x16xf32>
    %188 = arith.index_cast %c4_i32 : i32 to index
    %c0_33 = arith.constant 0 : index
    %189 = vector.load %arg2[%188, %c0_33] : memref<8x16xf32, #tpu.memory_space<vmem>>, vector<1x16xf32>
    tpu.vector_store %arg2[%188, %c0_33], %187 {strides = array<i32>} : memref<8x16xf32, #tpu.memory_space<vmem>>, vector<1x16xf32>,
    %c5_i32 = arith.constant 5 : i32
    %190 = arith.index_cast %c5_i32 : i32 to index
    %c0_34 = arith.constant 0 : index
    %191 = vector.load %arg0[%190, %c0_34] : memref<8x16xf32, #tpu.memory_space<vmem>>, vector<1x16xf32>
    %192 = vector.broadcast %191 : vector<1x16xf32> to vector<4x16xf32>
    %193 = arith.mulf %0, %192 : vector<4x16xf32>
    %194 = vector.broadcast %185 : vector<1x16xf32> to vector<4x16xf32>
    %195 = arith.mulf %1, %194 : vector<4x16xf32>
    %196 = arith.addf %193, %195 : vector<4x16xf32>
    %197 = arith.addf %196, %2 : vector<4x16xf32>
    %198 = vector.extract_strided_slice %197 {offsets = [0, 0], sizes = [1, 16], strides = [1, 1]} : vector<4x16xf32> to vector<1x16xf32>
    %199 = arith.negf %198 : vector<1x16xf32>
    %200 = math.exp %199 : vector<1x16xf32>
    %cst_35 = arith.constant 1.000000e+00 : f32
    %201 = vector.broadcast %cst_35 : f32 to vector<1x16xf32>
    %202 = arith.addf %201, %200 : vector<1x16xf32>
    %203 = arith.divf %201, %202 : vector<1x16xf32>
    %204 = vector.extract_strided_slice %197 {offsets = [1, 0], sizes = [1, 16], strides = [1, 1]} : vector<4x16xf32> to vector<1x16xf32>
    %205 = arith.negf %204 : vector<1x16xf32>
    %206 = math.exp %205 : vector<1x16xf32>
    %cst_36 = arith.constant 1.000000e+00 : f32
    %207 = vector.broadcast %cst_36 : f32 to vector<1x16xf32>
    %208 = arith.addf %207, %206 : vector<1x16xf32>
    %209 = arith.divf %207, %208 : vector<1x16xf32>
    %210 = vector.extract_strided_slice %197 {offsets = [2, 0], sizes = [1, 16], strides = [1, 1]} : vector<4x16xf32> to vector<1x16xf32>
    %211 = math.tanh %210 : vector<1x16xf32>
    %212 = vector.extract_strided_slice %197 {offsets = [3, 0], sizes = [1, 16], strides = [1, 1]} : vector<4x16xf32> to vector<1x16xf32>
    %213 = arith.negf %212 : vector<1x16xf32>
    %214 = math.exp %213 : vector<1x16xf32>
    %cst_37 = arith.constant 1.000000e+00 : f32
    %215 = vector.broadcast %cst_37 : f32 to vector<1x16xf32>
    %216 = arith.addf %215, %214 : vector<1x16xf32>
    %217 = arith.divf %215, %216 : vector<1x16xf32>
    %218 = arith.mulf %209, %183 : vector<1x16xf32>
    %219 = arith.mulf %203, %211 : vector<1x16xf32>
    %220 = arith.addf %218, %219 : vector<1x16xf32>
    %221 = math.tanh %220 : vector<1x16xf32>
    %222 = arith.mulf %217, %221 : vector<1x16xf32>
    %cst_38 = arith.constant 2.000000e+00 : f32
    %223 = vector.broadcast %cst_38 : f32 to vector<1x16xf32>
    %224 = arith.mulf %223, %222 : vector<1x16xf32>
    %225 = arith.index_cast %c5_i32 : i32 to index
    %c0_39 = arith.constant 0 : index
    %226 = vector.load %arg2[%225, %c0_39] : memref<8x16xf32, #tpu.memory_space<vmem>>, vector<1x16xf32>
    tpu.vector_store %arg2[%225, %c0_39], %224 {strides = array<i32>} : memref<8x16xf32, #tpu.memory_space<vmem>>, vector<1x16xf32>,
    %c6_i32 = arith.constant 6 : i32
    %227 = arith.index_cast %c6_i32 : i32 to index
    %c0_40 = arith.constant 0 : index
    %228 = vector.load %arg0[%227, %c0_40] : memref<8x16xf32, #tpu.memory_space<vmem>>, vector<1x16xf32>
    %229 = vector.broadcast %228 : vector<1x16xf32> to vector<4x16xf32>
    %230 = arith.mulf %0, %229 : vector<4x16xf32>
    %231 = vector.broadcast %222 : vector<1x16xf32> to vector<4x16xf32>
    %232 = arith.mulf %1, %231 : vector<4x16xf32>
    %233 = arith.addf %230, %232 : vector<4x16xf32>
    %234 = arith.addf %233, %2 : vector<4x16xf32>
    %235 = vector.extract_strided_slice %234 {offsets = [0, 0], sizes = [1, 16], strides = [1, 1]} : vector<4x16xf32> to vector<1x16xf32>
    %236 = arith.negf %235 : vector<1x16xf32>
    %237 = math.exp %236 : vector<1x16xf32>
    %cst_41 = arith.constant 1.000000e+00 : f32
    %238 = vector.broadcast %cst_41 : f32 to vector<1x16xf32>
    %239 = arith.addf %238, %237 : vector<1x16xf32>
    %240 = arith.divf %238, %239 : vector<1x16xf32>
    %241 = vector.extract_strided_slice %234 {offsets = [1, 0], sizes = [1, 16], strides = [1, 1]} : vector<4x16xf32> to vector<1x16xf32>
    %242 = arith.negf %241 : vector<1x16xf32>
    %243 = math.exp %242 : vector<1x16xf32>
    %cst_42 = arith.constant 1.000000e+00 : f32
    %244 = vector.broadcast %cst_42 : f32 to vector<1x16xf32>
    %245 = arith.addf %244, %243 : vector<1x16xf32>
    %246 = arith.divf %244, %245 : vector<1x16xf32>
    %247 = vector.extract_strided_slice %234 {offsets = [2, 0], sizes = [1, 16], strides = [1, 1]} : vector<4x16xf32> to vector<1x16xf32>
    %248 = math.tanh %247 : vector<1x16xf32>
    %249 = vector.extract_strided_slice %234 {offsets = [3, 0], sizes = [1, 16], strides = [1, 1]} : vector<4x16xf32> to vector<1x16xf32>
    %250 = arith.negf %249 : vector<1x16xf32>
    %251 = math.exp %250 : vector<1x16xf32>
    %cst_43 = arith.constant 1.000000e+00 : f32
    %252 = vector.broadcast %cst_43 : f32 to vector<1x16xf32>
    %253 = arith.addf %252, %251 : vector<1x16xf32>
    %254 = arith.divf %252, %253 : vector<1x16xf32>
    %255 = arith.mulf %246, %220 : vector<1x16xf32>
    %256 = arith.mulf %240, %248 : vector<1x16xf32>
    %257 = arith.addf %255, %256 : vector<1x16xf32>
    %258 = math.tanh %257 : vector<1x16xf32>
    %259 = arith.mulf %254, %258 : vector<1x16xf32>
    %cst_44 = arith.constant 2.000000e+00 : f32
    %260 = vector.broadcast %cst_44 : f32 to vector<1x16xf32>
    %261 = arith.mulf %260, %259 : vector<1x16xf32>
    %262 = arith.index_cast %c6_i32 : i32 to index
    %c0_45 = arith.constant 0 : index
    %263 = vector.load %arg2[%262, %c0_45] : memref<8x16xf32, #tpu.memory_space<vmem>>, vector<1x16xf32>
    tpu.vector_store %arg2[%262, %c0_45], %261 {strides = array<i32>} : memref<8x16xf32, #tpu.memory_space<vmem>>, vector<1x16xf32>,
    %c7_i32 = arith.constant 7 : i32
    %264 = arith.index_cast %c7_i32 : i32 to index
    %c0_46 = arith.constant 0 : index
    %265 = vector.load %arg0[%264, %c0_46] : memref<8x16xf32, #tpu.memory_space<vmem>>, vector<1x16xf32>
    %266 = vector.broadcast %265 : vector<1x16xf32> to vector<4x16xf32>
    %267 = arith.mulf %0, %266 : vector<4x16xf32>
    %268 = vector.broadcast %259 : vector<1x16xf32> to vector<4x16xf32>
    %269 = arith.mulf %1, %268 : vector<4x16xf32>
    %270 = arith.addf %267, %269 : vector<4x16xf32>
    %271 = arith.addf %270, %2 : vector<4x16xf32>
    %272 = vector.extract_strided_slice %271 {offsets = [0, 0], sizes = [1, 16], strides = [1, 1]} : vector<4x16xf32> to vector<1x16xf32>
    %273 = arith.negf %272 : vector<1x16xf32>
    %274 = math.exp %273 : vector<1x16xf32>
    %cst_47 = arith.constant 1.000000e+00 : f32
    %275 = vector.broadcast %cst_47 : f32 to vector<1x16xf32>
    %276 = arith.addf %275, %274 : vector<1x16xf32>
    %277 = arith.divf %275, %276 : vector<1x16xf32>
    %278 = vector.extract_strided_slice %271 {offsets = [1, 0], sizes = [1, 16], strides = [1, 1]} : vector<4x16xf32> to vector<1x16xf32>
    %279 = arith.negf %278 : vector<1x16xf32>
    %280 = math.exp %279 : vector<1x16xf32>
    %cst_48 = arith.constant 1.000000e+00 : f32
    %281 = vector.broadcast %cst_48 : f32 to vector<1x16xf32>
    %282 = arith.addf %281, %280 : vector<1x16xf32>
    %283 = arith.divf %281, %282 : vector<1x16xf32>
    %284 = vector.extract_strided_slice %271 {offsets = [2, 0], sizes = [1, 16], strides = [1, 1]} : vector<4x16xf32> to vector<1x16xf32>
    %285 = math.tanh %284 : vector<1x16xf32>
    %286 = vector.extract_strided_slice %271 {offsets = [3, 0], sizes = [1, 16], strides = [1, 1]} : vector<4x16xf32> to vector<1x16xf32>
    %287 = arith.negf %286 : vector<1x16xf32>
    %288 = math.exp %287 : vector<1x16xf32>
    %cst_49 = arith.constant 1.000000e+00 : f32
    %289 = vector.broadcast %cst_49 : f32 to vector<1x16xf32>
    %290 = arith.addf %289, %288 : vector<1x16xf32>
    %291 = arith.divf %289, %290 : vector<1x16xf32>
    %292 = arith.mulf %283, %257 : vector<1x16xf32>
    %293 = arith.mulf %277, %285 : vector<1x16xf32>
    %294 = arith.addf %292, %293 : vector<1x16xf32>
    %295 = math.tanh %294 : vector<1x16xf32>
    %296 = arith.mulf %291, %295 : vector<1x16xf32>
    %cst_50 = arith.constant 2.000000e+00 : f32
    %297 = vector.broadcast %cst_50 : f32 to vector<1x16xf32>
    %298 = arith.mulf %297, %296 : vector<1x16xf32>
    %299 = arith.index_cast %c7_i32 : i32 to index
    %c0_51 = arith.constant 0 : index
    %300 = vector.load %arg2[%299, %c0_51] : memref<8x16xf32, #tpu.memory_space<vmem>>, vector<1x16xf32>
    tpu.vector_store %arg2[%299, %c0_51], %298 {strides = array<i32>} : memref<8x16xf32, #tpu.memory_space<vmem>>, vector<1x16xf32>,
    %c8_i32 = arith.constant 8 : i32
    return
  }
}

</mosaic_0001>

<llo_original>
// kernel: tpu_custom_call.1
$region0: #{tpu_custom_call.1}
  #allocation0 [shape = 'u32[]', space=smem, size = 0x4, offset = 0x4, fixed_abs, tag = 'smem constant byte address 0x4 - core index']
  #allocation1 [shape = 'u32[144,128]{1,0:T(1,128)}', space=vmem, size = 0x12000, scoped, tag = 'internal scratch']
  %s0 = inlined_call_operand.hbm [shape: f32[8,16], index: 0, kind: input, shape index: {}]
  %s1 = inlined_call_operand.hbm [shape: f32[14,16], index: 1, kind: input, shape index: {}]
  %s2 = inlined_call_operand.hbm [shape: f32[8,16], index: 2, kind: output, shape index: {}]
  %s3 = sld [smem:[#allocation0]]
  $region26: #{tpu_custom_call.1} parent=0
    _
  %s5 = ssub.s32 1, %s3
  %s6 = scalar_select 0, %s5, %s3
  $region1: #{tpu_custom_call.1} parent=0
    #allocation2 [shape = 'u8[4096]{0}', space=vmem, size = 0x1000, scoped, tag = 'input window, operand 0, single buffered']
    #allocation3 [shape = 's32[1]{0}', space=sflag, size = 0x4, scoped, tag = 'scoped memory for tpu_custom_call.1']
    #allocation4 [shape = 's32[1]{0}', space=sflag, size = 0x4, scoped, tag = 'scoped memory for tpu_custom_call.1']
    #allocation5 [shape = 'u8[8192]{0}', space=vmem, size = 0x2000, scoped, tag = 'input window, operand 1, single buffered']
    #allocation6 [shape = 's32[1]{0}', space=sflag, size = 0x4, scoped, tag = 'scoped memory for tpu_custom_call.1']
    #allocation7 [shape = 'u8[4096]{0}', space=vmem, size = 0x1000, scoped, tag = 'output window, operand 0, single buffered']
    %7 = vsyncpa [#allocation3], 0
    %8 = vsyncpa [#allocation6], 0
    %9 = vsyncpa [#allocation4], 0
    // Predicated region
    $region2: #{tpu_custom_call.1} parent=1 // pred_check
      _
    $region3: #{tpu_custom_call.1} parent=1 // pred_check_branch
      %11 = sbr.rel (0) target = $region5
    $region4: #{tpu_custom_call.1} parent=1 // pred_region
      %s13 = ssub.s32 128, 128
      %14 = vsyncadd [#allocation3], %s13
      %s16 = sshll.u32 [#allocation2], 4
      %s17 = int_to_ptr.vmem [resolvable:$true] %s16
      %19 = dma.hbm_to_vmem [thread:$0]  %s0, 128, %s17, [#allocation3]
    $region5: #{tpu_custom_call.1} parent=1 // pred_fallthru
      _
    // Predicated region
    $region6: #{tpu_custom_call.1} parent=1 // pred_check
      _
    $region7: #{tpu_custom_call.1} parent=1 // pred_check_branch
      %21 = sbr.rel (0) target = $region9
    $region8: #{tpu_custom_call.1} parent=1 // pred_region
      %s23 = ssub.s32 256, 256
      %24 = vsyncadd [#allocation6], %s23
      %s25 = sshll.u32 [#allocation5], 4
      %s26 = int_to_ptr.vmem [resolvable:$true] %s25
      %31 = dma.hbm_to_vmem [thread:$0]  %s1, 256, %s26, [#allocation6], 128, 128, 8
    $region9: #{tpu_custom_call.1} parent=1 // pred_fallthru
      _
    // Predicated region
    $region10: #{tpu_custom_call.1} parent=1 // pred_check
      _
    $region11: #{tpu_custom_call.1} parent=1 // pred_check_branch
      %33 = sbr.rel (0) target = $region13
    $region12: #{tpu_custom_call.1} parent=1 // pred_region
      %34 = dma.done [#allocation3], 128
    $region13: #{tpu_custom_call.1} parent=1 // pred_fallthru
      _
    // Predicated region
    $region14: #{tpu_custom_call.1} parent=1 // pred_check
      _
    $region15: #{tpu_custom_call.1} parent=1 // pred_check_branch
      %36 = sbr.rel (0) target = $region17
    $region16: #{tpu_custom_call.1} parent=1 // pred_region
      %37 = dma.done [#allocation6], 256
    $region17: #{tpu_custom_call.1} parent=1 // pred_fallthru
      _
    %v38 = vld [vmem:[#allocation5] sm:$0xf]
    %v39 = vld [vmem:[#allocation5 + $0x4] sm:$0xf]
    %v40 = vld [vmem:[#allocation5 + $0x8] sm:$0xf]
    %v41 = vld [vmem:[#allocation5 + $0xc] sm:$0x1]
    %v42 = vld [vmem:[#allocation5 + $0xd] sm:$0x1]
    %v43 = vld [vmem:[#allocation2] sm:$0x1]
    %v44 = vlaneseq
    %v45 = vshrl.u32 %v44, 7
    %v46 = vsub.s32 0, %v45
    %v47 = vrot.slane %v43, %v46
    %v48 = vmul.f32 %v38, %v47
    %v49 = vlaneseq
    %v50 = vshrl.u32 %v49, 7
    %v51 = vsub.s32 0, %v50
    %v52 = vrot.slane %v41, %v51
    %v53 = vmul.f32 %v39, %v52
    %v54 = vadd.f32 %v48, %v53
    %v55 = vadd.f32 %v54, %v40
    %v56 = vxor.u32 %v55, 2147483648
    %v57 = vmul.f32 %v56, 1.442695
    %v58 = vpow.pop %v57
    %v59 = vadd.f32 %v58, 1.0
    %v60 = vrcp.pop %v59
    %v61 = vmul.f32 1.0, %v60
    %v62 = vtanh.pop %v55
    %v64 = vrot.slane %v42, 7
    %v66 = vmul.f32 %v61, %v64
    %v68 = vrot.slane %v62, 2
    %v70 = vmul.f32 %v61, %v68
    %v72 = vrot.slane %v70, 7
    %v74 = vadd.f32 %v66, %v72
    %v75 = vtanh.pop %v74
    %v77 = vrot.slane %v75, 6
    %v79 = vmul.f32 %v61, %v77
    %v80 = vmul.f32 %v79, 2.0
    %vm81 = vcmask 125955
    %82 = vst.msk [vmem:[#allocation7 - $0x3] sm:$0x8] %vm81, %v80
    %v83 = vld [vmem:[#allocation2 + $0x1] sm:$0x1]
    %v84 = vlaneseq
    %v85 = vshrl.u32 %v84, 7
    %v86 = vsub.s32 0, %v85
    %v87 = vrot.slane %v83, %v86
    %v88 = vmul.f32 %v38, %v87
    %v89 = vlaneseq
    %v90 = vshrl.u32 %v89, 7
    %v91 = vsub.s32 3, %v90
    %v92 = vrot.slane %v79, %v91
    %v93 = vmul.f32 %v39, %v92
    %v94 = vadd.f32 %v88, %v93
    %v95 = vadd.f32 %v94, %v40
    %v96 = vxor.u32 %v95, 2147483648
    %v97 = vmul.f32 %v96, 1.442695
    %v98 = vpow.pop %v97
    %v99 = vadd.f32 %v98, 1.0
    %v100 = vrcp.pop %v99
    %v101 = vmul.f32 1.0, %v100
    %v102 = vtanh.pop %v95
    %v103 = vmul.f32 %v101, %v74
    %v105 = vrot.slane %v102, 2
    %v107 = vmul.f32 %v101, %v105
    %v109 = vrot.slane %v107, 7
    %v111 = vadd.f32 %v103, %v109
    %v112 = vtanh.pop %v111
    %v114 = vrot.slane %v112, 6
    %v116 = vmul.f32 %v101, %v114
    %v117 = vmul.f32 %v116, 2.0
    %118 = vst.msk [vmem:[#allocation7 - $0x2] sm:$0x8] %vm81, %v117
    %v119 = vld [vmem:[#allocation2 + $0x2] sm:$0x1]
    %v120 = vlaneseq
    %v121 = vshrl.u32 %v120, 7
    %v122 = vsub.s32 0, %v121
    %v123 = vrot.slane %v119, %v122
    %v124 = vmul.f32 %v38, %v123
    %v125 = vlaneseq
    %v126 = vshrl.u32 %v125, 7
    %v127 = vsub.s32 3, %v126
    %v128 = vrot.slane %v116, %v127
    %v129 = vmul.f32 %v39, %v128
    %v130 = vadd.f32 %v124, %v129
    %v131 = vadd.f32 %v130, %v40
    %v132 = vxor.u32 %v131, 2147483648
    %v133 = vmul.f32 %v132, 1.442695
    %v134 = vpow.pop %v133
    %v135 = vadd.f32 %v134, 1.0
    %v136 = vrcp.pop %v135
    %v137 = vmul.f32 1.0, %v136
    %v138 = vtanh.pop %v131
    %v139 = vmul.f32 %v137, %v111
    %v141 = vrot.slane %v138, 2
    %v143 = vmul.f32 %v137, %v141
    %v145 = vrot.slane %v143, 7
    %v147 = vadd.f32 %v139, %v145
    %v148 = vtanh.pop %v147
    %v150 = vrot.slane %v148, 6
    %v152 = vmul.f32 %v137, %v150
    %v153 = vmul.f32 %v152, 2.0
    %154 = vst.msk [vmem:[#allocation7 - $0x1] sm:$0x8] %vm81, %v153
    %v155 = vld [vmem:[#allocation2 + $0x3] sm:$0x1]
    %v156 = vlaneseq
    %v157 = vshrl.u32 %v156, 7
    %v158 = vsub.s32 0, %v157
    %v159 = vrot.slane %v155, %v158
    %v160 = vmul.f32 %v38, %v159
    %v161 = vlaneseq
    %v162 = vshrl.u32 %v161, 7
    %v163 = vsub.s32 3, %v162
    %v164 = vrot.slane %v152, %v163
    %v165 = vmul.f32 %v39, %v164
    %v166 = vadd.f32 %v160, %v165
    %v167 = vadd.f32 %v166, %v40
    %v168 = vxor.u32 %v167, 2147483648
    %v169 = vmul.f32 %v168, 1.442695
    %v170 = vpow.pop %v169
    %v171 = vadd.f32 %v170, 1.0
    %v172 = vrcp.pop %v171
    %v173 = vmul.f32 1.0, %v172
    %v174 = vtanh.pop %v167
    %v175 = vmul.f32 %v173, %v147
    %v177 = vrot.slane %v174, 2
    %v179 = vmul.f32 %v173, %v177
    %v181 = vrot.slane %v179, 7
    %v183 = vadd.f32 %v175, %v181
    %v184 = vtanh.pop %v183
    %v186 = vrot.slane %v184, 6
    %v188 = vmul.f32 %v173, %v186
    %v189 = vmul.f32 %v188, 2.0
    %190 = vst.msk [vmem:[#allocation7] sm:$0x8] %vm81, %v189
    %v191 = vld [vmem:[#allocation2 + $0x4] sm:$0x1]
    %v192 = vlaneseq
    %v193 = vshrl.u32 %v192, 7
    %v194 = vsub.s32 0, %v193
    %v195 = vrot.slane %v191, %v194
    %v196 = vmul.f32 %v38, %v195
    %v197 = vlaneseq
    %v198 = vshrl.u32 %v197, 7
    %v199 = vsub.s32 3, %v198
    %v200 = vrot.slane %v188, %v199
    %v201 = vmul.f32 %v39, %v200
    %v202 = vadd.f32 %v196, %v201
    %v203 = vadd.f32 %v202, %v40
    %v204 = vxor.u32 %v203, 2147483648
    %v205 = vmul.f32 %v204, 1.442695
    %v206 = vpow.pop %v205
    %v207 = vadd.f32 %v206, 1.0
    %v208 = vrcp.pop %v207
    %v209 = vmul.f32 1.0, %v208
    %v210 = vtanh.pop %v203
    %v211 = vmul.f32 %v209, %v183
    %v213 = vrot.slane %v210, 2
    %v215 = vmul.f32 %v209, %v213
    %v217 = vrot.slane %v215, 7
    %v219 = vadd.f32 %v211, %v217
    %v220 = vtanh.pop %v219
    %v222 = vrot.slane %v220, 6
    %v224 = vmul.f32 %v209, %v222
    %v225 = vmul.f32 %v224, 2.0
    %226 = vst.msk [vmem:[#allocation7 + $0x1] sm:$0x8] %vm81, %v225
    %v227 = vld [vmem:[#allocation2 + $0x5] sm:$0x1]
    %v228 = vlaneseq
    %v229 = vshrl.u32 %v228, 7
    %v230 = vsub.s32 0, %v229
    %v231 = vrot.slane %v227, %v230
    %v232 = vmul.f32 %v38, %v231
    %v233 = vlaneseq
    %v234 = vshrl.u32 %v233, 7
    %v235 = vsub.s32 3, %v234
    %v236 = vrot.slane %v224, %v235
    %v237 = vmul.f32 %v39, %v236
    %v238 = vadd.f32 %v232, %v237
    %v239 = vadd.f32 %v238, %v40
    %v240 = vxor.u32 %v239, 2147483648
    %v241 = vmul.f32 %v240, 1.442695
    %v242 = vpow.pop %v241
    %v243 = vadd.f32 %v242, 1.0
    %v244 = vrcp.pop %v243
    %v245 = vmul.f32 1.0, %v244
    %v246 = vtanh.pop %v239
    %v247 = vmul.f32 %v245, %v219
    %v249 = vrot.slane %v246, 2
    %v251 = vmul.f32 %v245, %v249
    %v253 = vrot.slane %v251, 7
    %v255 = vadd.f32 %v247, %v253
    %v256 = vtanh.pop %v255
    %v258 = vrot.slane %v256, 6
    %v260 = vmul.f32 %v245, %v258
    %v261 = vmul.f32 %v260, 2.0
    %262 = vst.msk [vmem:[#allocation7 + $0x2] sm:$0x8] %vm81, %v261
    %v263 = vld [vmem:[#allocation2 + $0x6] sm:$0x1]
    %v264 = vlaneseq
    %v265 = vshrl.u32 %v264, 7
    %v266 = vsub.s32 0, %v265
    %v267 = vrot.slane %v263, %v266
    %v268 = vmul.f32 %v38, %v267
    %v269 = vlaneseq
    %v270 = vshrl.u32 %v269, 7
    %v271 = vsub.s32 3, %v270
    %v272 = vrot.slane %v260, %v271
    %v273 = vmul.f32 %v39, %v272
    %v274 = vadd.f32 %v268, %v273
    %v275 = vadd.f32 %v274, %v40
    %v276 = vxor.u32 %v275, 2147483648
    %v277 = vmul.f32 %v276, 1.442695
    %v278 = vpow.pop %v277
    %v279 = vadd.f32 %v278, 1.0
    %v280 = vrcp.pop %v279
    %v281 = vmul.f32 1.0, %v280
    %v282 = vtanh.pop %v275
    %v283 = vmul.f32 %v281, %v255
    %v285 = vrot.slane %v282, 2
    %v287 = vmul.f32 %v281, %v285
    %v289 = vrot.slane %v287, 7
    %v291 = vadd.f32 %v283, %v289
    %v292 = vtanh.pop %v291
    %v294 = vrot.slane %v292, 6
    %v296 = vmul.f32 %v281, %v294
    %v297 = vmul.f32 %v296, 2.0
    %298 = vst.msk [vmem:[#allocation7 + $0x3] sm:$0x8] %vm81, %v297
    %v299 = vld [vmem:[#allocation2 + $0x7] sm:$0x1]
    %v300 = vlaneseq
    %v301 = vshrl.u32 %v300, 7
    %v302 = vsub.s32 0, %v301
    %v303 = vrot.slane %v299, %v302
    %v304 = vmul.f32 %v38, %v303
    %v305 = vlaneseq
    %v306 = vshrl.u32 %v305, 7
    %v307 = vsub.s32 3, %v306
    %v308 = vrot.slane %v296, %v307
    %v309 = vmul.f32 %v39, %v308
    %v310 = vadd.f32 %v304, %v309
    %v311 = vadd.f32 %v310, %v40
    %v312 = vxor.u32 %v311, 2147483648
    %v313 = vmul.f32 %v312, 1.442695
    %v314 = vpow.pop %v313
    %v315 = vadd.f32 %v314, 1.0
    %v316 = vrcp.pop %v315
    %v317 = vmul.f32 1.0, %v316
    %v318 = vtanh.pop %v311
    %v319 = vmul.f32 %v317, %v291
    %v321 = vrot.slane %v318, 2
    %v323 = vmul.f32 %v317, %v321
    %v325 = vrot.slane %v323, 7
    %v327 = vadd.f32 %v319, %v325
    %v328 = vtanh.pop %v327
    %v330 = vrot.slane %v328, 6
    %v332 = vmul.f32 %v317, %v330
    %v333 = vmul.f32 %v332, 2.0
    %334 = vst.msk [vmem:[#allocation7 + $0x4] sm:$0x8] %vm81, %v333
    // Predicated region
    $region18: #{tpu_custom_call.1} parent=1 // pred_check
      _
    $region19: #{tpu_custom_call.1} parent=1 // pred_check_branch
      %336 = sbr.rel (0) target = $region21
    $region20: #{tpu_custom_call.1} parent=1 // pred_region
      %s338 = ssub.s32 128, 128
      %339 = vsyncadd [#allocation4], %s338
      %s341 = sshll.u32 [#allocation7], 4
      %s342 = int_to_ptr.vmem [resolvable:$true] %s341
      %344 = dma.vmem_to_hbm [thread:$0]  %s342, 128, %s2, [#allocation4]
    $region21: #{tpu_custom_call.1} parent=1 // pred_fallthru
      _
    // Predicated region
    $region22: #{tpu_custom_call.1} parent=1 // pred_check
      _
    $region23: #{tpu_custom_call.1} parent=1 // pred_check_branch
      %346 = sbr.rel (0) target = $region25
    $region24: #{tpu_custom_call.1} parent=1 // pred_region
      %347 = dma.done [#allocation4], 128
    $region25: #{tpu_custom_call.1} parent=1 // pred_fallthru
      _
    %348 = vsyncpa [#allocation3], 1
    %349 = vsyncpa [#allocation6], 1
    %350 = vsyncpa [#allocation4], 1

</llo_original>
